<compile_context>
chip_gen: v6e
topology: v6e:2x2x1
jax: 0.10.0
libtpu: 0.0.40
codegen_flags: <defaults>
</compile_context>

<pallas_src>
import functools

import jax
import jax.numpy as jnp
from jax import lax
from jax.experimental import pallas as pl
from jax.experimental.pallas import tpu as pltpu

_LANES = 128
_SUBLANES = 8
_NEG_BIG = -1e30                      # finite "-inf" stand-in (keeps online rescale NaN-free)
_LOG_CLAMP = 4.605170185988092        # log(100.0)


def _reps_loss_kernel(params_ref,                       # SMEM (1,): [1/eta]
                      logp_ref, val_ref, tgt_ref,       # VMEM (block_rows, 128) tiles
                      out_ref,                          # VMEM (1, 128) per-core packed partials
                      m_vec, s_vec, td_vec, wlp_vec,    # VMEM (8, 128) accumulators
                      *, batch, block_rows, steps_per_core):
    i = pl.program_id(0)              # core slot (parallel axis)
    j = pl.program_id(1)              # streaming step within this core (arbitrary axis)
    n_j = pl.num_programs(1)

    @pl.when(j == 0)
    def _init():
        m_vec[...] = jnp.full_like(m_vec, _NEG_BIG)
        s_vec[...] = jnp.zeros_like(s_vec)
        td_vec[...] = jnp.zeros_like(td_vec)
        wlp_vec[...] = jnp.zeros_like(wlp_vec)

    inv_eta = params_ref[0]

    logp = logp_ref[...]
    td_raw = tgt_ref[...] - val_ref[...]
    w = td_raw * inv_eta                                  # multiply, not a vector divide
    # clamp folded into the exponent: exp(min(w, log 100)) == clamp_max(exp(w), 100)
    wlp_raw = jnp.exp(jnp.minimum(w, _LOG_CLAMP)) * logp

    k = block_rows // _SUBLANES

    def _accumulate(w_t, td_t, wlp_t):
        # Online logsumexp; element-wise only (VPU/EUP). Masked entries carry
        # w == _NEG_BIG: exp(_NEG_BIG - m_real) underflows to 0, and columns that
        # never see a valid element keep m == _NEG_BIG and get wiped by the
        # exp(m - m_all) rescale at combine time, so no explicit where() needed here.
        w3 = w_t.reshape(k, _SUBLANES, _LANES)
        m_old = m_vec[...]
        m_new = jnp.maximum(m_old, jnp.max(w3, axis=0))
        e3 = jnp.exp(w3 - m_new[None, :, :])
        s_vec[...] = s_vec[...] * jnp.exp(m_old - m_new) + jnp.sum(e3, axis=0)
        m_vec[...] = m_new
        td_vec[...] = td_vec[...] + jnp.sum(td_t.reshape(k, _SUBLANES, _LANES), axis=0)
        wlp_vec[...] = wlp_vec[...] + jnp.sum(wlp_t.reshape(k, _SUBLANES, _LANES), axis=0)

    global_tile = i * steps_per_core + j
    tile_elems = block_rows * _LANES
    # int32 index math: documented limit of ~2.1e9 total elements.
    has_pad = (global_tile + 1) * tile_elems > batch

    @pl.when(jnp.logical_not(has_pad))
    def _fast():
        # Steady state: no iota / mask / select arithmetic.
        _accumulate(w, td_raw, wlp_raw)

    @pl.when(has_pad)
    def _masked():
        # Only tiles containing padded-tail elements (at most a couple per call).
        row = lax.broadcasted_iota(jnp.int32, (block_rows, _LANES), 0)
        lane = lax.broadcasted_iota(jnp.int32, (block_rows, _LANES), 1)
        gidx = (global_tile * block_rows + row) * _LANES + lane
        valid = gidx < batch
        _accumulate(jnp.where(valid, w, _NEG_BIG),
                    jnp.where(valid, td_raw, 0.0),
                    jnp.where(valid, wlp_raw, 0.0))

    @pl.when(j == n_j - 1)
    def _finalize():
        # Only place with cross-lane/sublane (XLU) reductions; emit per-core partials.
        m_core = jnp.max(m_vec[...])
        s_core = jnp.sum(s_vec[...] * jnp.exp(m_vec[...] - m_core))
        td_core = jnp.sum(td_vec[...])
        wlp_core = jnp.sum(wlp_vec[...])
        lane = lax.broadcasted_iota(jnp.int32, (1, _LANES), 1)
        out_ref[...] = jnp.where(lane == 0, m_core,
                       jnp.where(lane == 1, s_core,
                       jnp.where(lane == 2, td_core,
                       jnp.where(lane == 3, wlp_core, 0.0))))


def _reps_loss_fused(logp, val, tgt, eta, epsilon, batch):
    """Fused pure-JAX path for tiny batches (launch/DMA overhead dominates)."""
    td = tgt - val
    w = td / eta
    normalizer = jax.nn.logsumexp(w)
    dual_loss = jnp.reshape(eta * (epsilon + normalizer), (1,))
    policy_loss = -jnp.sum(jnp.minimum(jnp.exp(w), 100.0) * logp) / batch
    td_error = jnp.sum(td) / batch
    return policy_loss, dual_loss, td_error


def reps_loss(action_log_p, value, target, eta=1.0, epsilon=0.1,
              block_rows=2048, num_cores=2,
              small_batch_bytes=1 << 20, force_kernel=False):
    """Pallas implementation of REPSLoss.forward.

    Inputs are [B, 1] (matching the PyTorch module); returns
    (policy_loss: scalar, dual_loss: [1], td_error: scalar), all float32.
    """
    logp = jnp.asarray(action_log_p, jnp.float32).reshape(-1)
    val = jnp.asarray(value, jnp.float32).reshape(-1)
    tgt = jnp.asarray(target, jnp.float32).reshape(-1)
    B = int(logp.shape[0])

    eta_f = jnp.float32(eta)
    eps_f = jnp.float32(epsilon)

    # Small-batch fallback (3 f32 inputs = 12 B/element).
    if (B * 12 < small_batch_bytes) and not force_kernel:
        return _reps_loss_fused(logp, val, tgt, eta_f, eps_f, B)

    # Sublane+lane dense layout: flatten batch onto a (rows, 128) grid.
    rows = -(-B // _LANES)
    rows = -(-rows // _SUBLANES) * _SUBLANES             # multiple of 8
    br = max(_SUBLANES, min(int(block_rows), rows))
    br = (br // _SUBLANES) * _SUBLANES
    tiles_total = -(-rows // br)
    n_cores = max(1, min(int(num_cores), tiles_total))   # 2 TC slots on v7x; no-op elsewhere
    steps_per_core = -(-tiles_total // n_cores)
    rows_pad = n_cores * steps_per_core * br
    n_pad = rows_pad * _LANES

    def prep(x):
        return jnp.pad(x, (0, n_pad - B)).reshape(rows_pad, _LANES)

    params = jnp.asarray([1.0], jnp.float32) / eta_f      # [1/eta] in SMEM

    def in_map(i, j, p):
        return (i * steps_per_core + j, 0)

    grid_spec = pltpu.PrefetchScalarGridSpec(
        num_scalar_prefetch=1,
        grid=(n_cores, steps_per_core),
        in_specs=[
            pl.BlockSpec((br, _LANES), in_map),
            pl.BlockSpec((br, _LANES), in_map),
            pl.BlockSpec((br, _LANES), in_map),
        ],
        out_specs=pl.BlockSpec((1, _LANES), lambda i, j, p: (i, 0)),
        scratch_shapes=[pltpu.VMEM((_SUBLANES, _LANES), jnp.float32)] * 4,
    )

    parts = pl.pallas_call(
        functools.partial(_reps_loss_kernel, batch=B, block_rows=br,
                          steps_per_core=steps_per_core),
        out_shape=jax.ShapeDtypeStruct((n_cores, _LANES), jnp.float32),
        grid_spec=grid_spec,
        compiler_params=pltpu.CompilerParams(
            dimension_semantics=("parallel", "arbitrary"),
            vmem_limit_bytes=32 * 1024 * 1024),
    )(params, prep(logp), prep(val), prep(tgt))

    # Tiny cross-core combine (<= num_cores partial rows); XLA fuses this.
    m_c = parts[:, 0]
    s_c = parts[:, 1]
    td_c = parts[:, 2]
    wlp_c = parts[:, 3]
    m_all = jnp.max(m_c)
    total = jnp.sum(s_c * jnp.exp(m_c - m_all))
    normalizer = m_all + jnp.log(total)
    dual_loss = jnp.reshape(eta_f * (eps_f + normalizer), (1,))
    policy_loss = -(jnp.sum(wlp_c) / B)
    td_error = jnp.sum(td_c) / B
    return policy_loss, dual_loss, td_error


def _reps_loss_ref(action_log_p, value, target, eta=1.0, epsilon=0.1):
    """Pure-JAX reference mirroring the PyTorch forward (inputs [B, 1])."""
    td = target - value
    w = td / eta
    normalizer = jax.nn.logsumexp(w, axis=0)              # [1]
    dual_loss = eta * (epsilon + normalizer)
    wlp = jnp.minimum(jnp.exp(w), 100.0) * action_log_p
    policy_loss = -jnp.mean(wlp)
    return policy_loss, dual_loss, jnp.mean(td)


if __name__ == "__main__":
    # Deterministic parameter init mirroring __init__:
    #   _eta = Learnable(1.0, positive=True) -> eta() == 1.0 at init; epsilon = 0.1
    ETA = 1.0
    EPSILON = 0.1

    def _check(got, ref, tol):
        for g, r in zip(got, ref):
            assert jnp.allclose(g, r, atol=tol, rtol=tol), (g, r)

    # 1) Module-nominal tiny shape (B=8 column vectors), forced through the kernel.
    B = 8
    k1, k2, k3 = jax.random.split(jax.random.PRNGKey(0), 3)
    action_log_p = -jax.nn.softplus(jax.random.normal(k1, (B, 1), jnp.float32))
    value = jax.random.normal(k2, (B, 1), jnp.float32)
    target = value + 0.5 * jax.random.normal(k3, (B, 1), jnp.float32)

    out = reps_loss(action_log_p, value, target, eta=ETA, epsilon=EPSILON,
                    force_kernel=True)
    jax.block_until_ready(out)
    refs = _reps_loss_ref(action_log_p, value, target, ETA, EPSILON)
    _check(out, refs, 1e-5)

    # 2) Default path on the same inputs exercises the small-batch fused fallback.
    out_fb = reps_loss(action_log_p, value, target, eta=ETA, epsilon=EPSILON)
    jax.block_until_ready(out_fb)
    _check(out_fb, refs, 1e-5)

    # 3) Multi-step tiled path: >1 step per core slot, per-core partial combine,
    #    unmasked fast-path tiles AND masked partial/fully-padded tail tiles.
    B2 = 3000
    k4, k5, k6 = jax.random.split(jax.random.PRNGKey(1), 3)
    alp2 = -jax.nn.softplus(jax.random.normal(k4, (B2, 1), jnp.float32))
    val2 = jax.random.normal(k5, (B2, 1), jnp.float32)
    tgt2 = val2 + 0.5 * jax.random.normal(k6, (B2, 1), jnp.float32)

    out2 = reps_loss(alp2, val2, tgt2, eta=ETA, epsilon=EPSILON,
                     block_rows=8, force_kernel=True)
    jax.block_until_ready(out2)
    refs2 = _reps_loss_ref(alp2, val2, tgt2, ETA, EPSILON)
    _check(out2, refs2, 1e-4)

    print("KERNEL_OK")
</pallas_src>

<mosaic_0001>
module attributes {stable_mosaic.version = 11 : i64} {
  func.func @_reps_loss_kernel(%arg0: i32, %arg1: i32, %arg2: memref<1xf32, #tpu.memory_space<smem>>, %arg3: memref<8x128xf32, #tpu.memory_space<vmem>>, %arg4: memref<8x128xf32, #tpu.memory_space<vmem>>, %arg5: memref<8x128xf32, #tpu.memory_space<vmem>>, %arg6: memref<1x128xf32, #tpu.memory_space<vmem>>, %arg7: memref<8x128xf32, #tpu.memory_space<vmem>>, %arg8: memref<8x128xf32, #tpu.memory_space<vmem>>, %arg9: memref<8x128xf32, #tpu.memory_space<vmem>>, %arg10: memref<8x128xf32, #tpu.memory_space<vmem>>) attributes {dimension_semantics = [#tpu.dimension_semantics<parallel>, #tpu.dimension_semantics<arbitrary>], iteration_bounds = array<i64: 1, 1>, scalar_prefetch = 1 : i64, scratch_operands = 4 : i64, tpu.core_type = #tpu.core_type<tc>, window_params = [{transform_indices = @transform_0, window_bounds = array<i64: 8, 128>}, {transform_indices = @transform_1, window_bounds = array<i64: 8, 128>}, {transform_indices = @transform_2, window_bounds = array<i64: 8, 128>}, {transform_indices = @transform_3, window_bounds = array<i64: 1, 128>}]} {
    %c0_i32 = arith.constant 0 : i32
    %0 = arith.cmpi eq, %arg1, %c0_i32 : i32
    %1 = arith.extui %0 : i1 to i32
    %c0_i32_0 = arith.constant 0 : i32
    %2 = arith.cmpi ne, %1, %c0_i32_0 : i32
    scf.if %2 {
      %cst_12 = arith.constant -1.000000e+30 : f32
      %27 = vector.broadcast %cst_12 : f32 to vector<8x128xf32>
      %c0_13 = arith.constant 0 : index
      %c0_14 = arith.constant 0 : index
      %28 = vector.load %arg7[%c0_13, %c0_14] : memref<8x128xf32, #tpu.memory_space<vmem>>, vector<8x128xf32>
      tpu.vector_store %arg7[%c0_13, %c0_14], %27 {strides = array<i32>} : memref<8x128xf32, #tpu.memory_space<vmem>>, vector<8x128xf32>,
      %cst_15 = arith.constant 0.000000e+00 : f32
      %29 = vector.broadcast %cst_15 : f32 to vector<8x128xf32>
      %c0_16 = arith.constant 0 : index
      %c0_17 = arith.constant 0 : index
      %30 = vector.load %arg8[%c0_16, %c0_17] : memref<8x128xf32, #tpu.memory_space<vmem>>, vector<8x128xf32>
      tpu.vector_store %arg8[%c0_16, %c0_17], %29 {strides = array<i32>} : memref<8x128xf32, #tpu.memory_space<vmem>>, vector<8x128xf32>,
      %cst_18 = arith.constant 0.000000e+00 : f32
      %31 = vector.broadcast %cst_18 : f32 to vector<8x128xf32>
      %c0_19 = arith.constant 0 : index
      %c0_20 = arith.constant 0 : index
      %32 = vector.load %arg9[%c0_19, %c0_20] : memref<8x128xf32, #tpu.memory_space<vmem>>, vector<8x128xf32>
      tpu.vector_store %arg9[%c0_19, %c0_20], %31 {strides = array<i32>} : memref<8x128xf32, #tpu.memory_space<vmem>>, vector<8x128xf32>,
      %cst_21 = arith.constant 0.000000e+00 : f32
      %33 = vector.broadcast %cst_21 : f32 to vector<8x128xf32>
      %c0_22 = arith.constant 0 : index
      %c0_23 = arith.constant 0 : index
      %34 = vector.load %arg10[%c0_22, %c0_23] : memref<8x128xf32, #tpu.memory_space<vmem>>, vector<8x128xf32>
      tpu.vector_store %arg10[%c0_22, %c0_23], %33 {strides = array<i32>} : memref<8x128xf32, #tpu.memory_space<vmem>>, vector<8x128xf32>,
    } else {
    }
    %c0 = arith.constant 0 : index
    %3 = memref.load %arg2[%c0] : memref<1xf32, #tpu.memory_space<smem>>
    %c0_1 = arith.constant 0 : index
    %c0_2 = arith.constant 0 : index
    %4 = vector.load %arg3[%c0_1, %c0_2] : memref<8x128xf32, #tpu.memory_space<vmem>>, vector<8x128xf32>
    %c0_3 = arith.constant 0 : index
    %c0_4 = arith.constant 0 : index
    %5 = vector.load %arg5[%c0_3, %c0_4] : memref<8x128xf32, #tpu.memory_space<vmem>>, vector<8x128xf32>
    %c0_5 = arith.constant 0 : index
    %c0_6 = arith.constant 0 : index
    %6 = vector.load %arg4[%c0_5, %c0_6] : memref<8x128xf32, #tpu.memory_space<vmem>>, vector<8x128xf32>
    %7 = arith.subf %5, %6 : vector<8x128xf32>
    %8 = vector.broadcast %3 : f32 to vector<8x128xf32>
    %9 = arith.mulf %7, %8 : vector<8x128xf32>
    %cst = arith.constant 4.60517025 : f32
    %10 = vector.broadcast %cst : f32 to vector<8x128xf32>
    %11 = arith.minimumf %9, %10 : vector<8x128xf32>
    %12 = math.exp %11 : vector<8x128xf32>
    %13 = arith.mulf %12, %4 : vector<8x128xf32>
    %c1_i32 = arith.constant 1 : i32
    %14 = arith.muli %arg0, %c1_i32 : i32
    %15 = arith.addi %14, %arg1 : i32
    %c1_i32_7 = arith.constant 1 : i32
    %16 = arith.addi %15, %c1_i32_7 : i32
    %c1024_i32 = arith.constant 1024 : i32
    %17 = arith.muli %16, %c1024_i32 : i32
    %c8_i32 = arith.constant 8 : i32
    %18 = arith.cmpi sgt, %17, %c8_i32 : i32
    %true = arith.constant true
    %19 = arith.xori %18, %true : i1
    %20 = arith.extui %19 : i1 to i32
    %c0_i32_8 = arith.constant 0 : i32
    %21 = arith.cmpi ne, %20, %c0_i32_8 : i32
    scf.if %21 {
      %27 = vector.shape_cast %9 : vector<8x128xf32> to vector<1x8x128xf32>
      %c0_12 = arith.constant 0 : index
      %c0_13 = arith.constant 0 : index
      %28 = vector.load %arg7[%c0_12, %c0_13] : memref<8x128xf32, #tpu.memory_space<vmem>>, vector<8x128xf32>
      %cst_14 = arith.constant dense<0xFF800000> : vector<8x128xf32>
      %29 = vector.multi_reduction <maximumf>, %27, %cst_14 [0] : vector<1x8x128xf32> to vector<8x128xf32>
      %30 = arith.maximumf %28, %29 : vector<8x128xf32>
      %31 = vector.shape_cast %30 : vector<8x128xf32> to vector<1x8x128xf32>
      %32 = arith.subf %27, %31 : vector<1x8x128xf32>
      %33 = math.exp %32 : vector<1x8x128xf32>
      %c0_15 = arith.constant 0 : index
      %c0_16 = arith.constant 0 : index
      %34 = vector.load %arg8[%c0_15, %c0_16] : memref<8x128xf32, #tpu.memory_space<vmem>>, vector<8x128xf32>
      %35 = arith.subf %28, %30 : vector<8x128xf32>
      %36 = math.exp %35 : vector<8x128xf32>
      %37 = arith.mulf %34, %36 : vector<8x128xf32>
      %cst_17 = arith.constant dense<0.000000e+00> : vector<8x128xf32>
      %38 = vector.multi_reduction <add>, %33, %cst_17 [0] : vector<1x8x128xf32> to vector<8x128xf32>
      %39 = arith.addf %37, %38 : vector<8x128xf32>
      %c0_18 = arith.constant 0 : index
      %c0_19 = arith.constant 0 : index
      %40 = vector.load %arg8[%c0_18, %c0_19] : memref<8x128xf32, #tpu.memory_space<vmem>>, vector<8x128xf32>
      tpu.vector_store %arg8[%c0_18, %c0_19], %39 {strides = array<i32>} : memref<8x128xf32, #tpu.memory_space<vmem>>, vector<8x128xf32>,
      %c0_20 = arith.constant 0 : index
      %c0_21 = arith.constant 0 : index
      %41 = vector.load %arg7[%c0_20, %c0_21] : memref<8x128xf32, #tpu.memory_space<vmem>>, vector<8x128xf32>
      tpu.vector_store %arg7[%c0_20, %c0_21], %30 {strides = array<i32>} : memref<8x128xf32, #tpu.memory_space<vmem>>, vector<8x128xf32>,
      %c0_22 = arith.constant 0 : index
      %c0_23 = arith.constant 0 : index
      %42 = vector.load %arg9[%c0_22, %c0_23] : memref<8x128xf32, #tpu.memory_space<vmem>>, vector<8x128xf32>
      %43 = vector.shape_cast %7 : vector<8x128xf32> to vector<1x8x128xf32>
      %cst_24 = arith.constant dense<0.000000e+00> : vector<8x128xf32>
      %44 = vector.multi_reduction <add>, %43, %cst_24 [0] : vector<1x8x128xf32> to vector<8x128xf32>
      %45 = arith.addf %42, %44 : vector<8x128xf32>
      %c0_25 = arith.constant 0 : index
      %c0_26 = arith.constant 0 : index
      %46 = vector.load %arg9[%c0_25, %c0_26] : memref<8x128xf32, #tpu.memory_space<vmem>>, vector<8x128xf32>
      tpu.vector_store %arg9[%c0_25, %c0_26], %45 {strides = array<i32>} : memref<8x128xf32, #tpu.memory_space<vmem>>, vector<8x128xf32>,
      %c0_27 = arith.constant 0 : index
      %c0_28 = arith.constant 0 : index
      %47 = vector.load %arg10[%c0_27, %c0_28] : memref<8x128xf32, #tpu.memory_space<vmem>>, vector<8x128xf32>
      %48 = vector.shape_cast %13 : vector<8x128xf32> to vector<1x8x128xf32>
      %cst_29 = arith.constant dense<0.000000e+00> : vector<8x128xf32>
      %49 = vector.multi_reduction <add>, %48, %cst_29 [0] : vector<1x8x128xf32> to vector<8x128xf32>
      %50 = arith.addf %47, %49 : vector<8x128xf32>
      %c0_30 = arith.constant 0 : index
      %c0_31 = arith.constant 0 : index
      %51 = vector.load %arg10[%c0_30, %c0_31] : memref<8x128xf32, #tpu.memory_space<vmem>>, vector<8x128xf32>
      tpu.vector_store %arg10[%c0_30, %c0_31], %50 {strides = array<i32>} : memref<8x128xf32, #tpu.memory_space<vmem>>, vector<8x128xf32>,
    } else {
    }
    %22 = arith.extui %18 : i1 to i32
    %c0_i32_9 = arith.constant 0 : i32
    %23 = arith.cmpi ne, %22, %c0_i32_9 : i32
    scf.if %23 {
      %27 = tpu.iota {dimensions = array<i32: 0>} : vector<8x128xi32>
      %28 = tpu.iota {dimensions = array<i32: 1>} : vector<8x128xi32>
      %c8_i32_12 = arith.constant 8 : i32
      %29 = arith.muli %15, %c8_i32_12 : i32
      %30 = vector.broadcast %29 : i32 to vector<8x128xi32>
      %31 = arith.addi %30, %27 : vector<8x128xi32>
      %c128_i32 = arith.constant 128 : i32
      %32 = vector.broadcast %c128_i32 : i32 to vector<8x128xi32>
      %33 = arith.muli %31, %32 : vector<8x128xi32>
      %34 = arith.addi %33, %28 : vector<8x128xi32>
      %c8_i32_13 = arith.constant 8 : i32
      %35 = vector.broadcast %c8_i32_13 : i32 to vector<8x128xi32>
      %36 = arith.cmpi slt, %34, %35 : vector<8x128xi32>
      %cst_14 = arith.constant -1.000000e+30 : f32
      %37 = vector.broadcast %cst_14 : f32 to vector<8x128xf32>
      %38 = arith.select %36, %9, %37 : vector<8x128xi1>, vector<8x128xf32>
      %cst_15 = arith.constant 0.000000e+00 : f32
      %39 = vector.broadcast %cst_15 : f32 to vector<8x128xf32>
      %40 = arith.select %36, %7, %39 : vector<8x128xi1>, vector<8x128xf32>
      %cst_16 = arith.constant 0.000000e+00 : f32
      %41 = vector.broadcast %cst_16 : f32 to vector<8x128xf32>
      %42 = arith.select %36, %13, %41 : vector<8x128xi1>, vector<8x128xf32>
      %43 = vector.shape_cast %38 : vector<8x128xf32> to vector<1x8x128xf32>
      %c0_17 = arith.constant 0 : index
      %c0_18 = arith.constant 0 : index
      %44 = vector.load %arg7[%c0_17, %c0_18] : memref<8x128xf32, #tpu.memory_space<vmem>>, vector<8x128xf32>
      %cst_19 = arith.constant dense<0xFF800000> : vector<8x128xf32>
      %45 = vector.multi_reduction <maximumf>, %43, %cst_19 [0] : vector<1x8x128xf32> to vector<8x128xf32>
      %46 = arith.maximumf %44, %45 : vector<8x128xf32>
      %47 = vector.shape_cast %46 : vector<8x128xf32> to vector<1x8x128xf32>
      %48 = arith.subf %43, %47 : vector<1x8x128xf32>
      %49 = math.exp %48 : vector<1x8x128xf32>
      %c0_20 = arith.constant 0 : index
      %c0_21 = arith.constant 0 : index
      %50 = vector.load %arg8[%c0_20, %c0_21] : memref<8x128xf32, #tpu.memory_space<vmem>>, vector<8x128xf32>
      %51 = arith.subf %44, %46 : vector<8x128xf32>
      %52 = math.exp %51 : vector<8x128xf32>
      %53 = arith.mulf %50, %52 : vector<8x128xf32>
      %cst_22 = arith.constant dense<0.000000e+00> : vector<8x128xf32>
      %54 = vector.multi_reduction <add>, %49, %cst_22 [0] : vector<1x8x128xf32> to vector<8x128xf32>
      %55 = arith.addf %53, %54 : vector<8x128xf32>
      %c0_23 = arith.constant 0 : index
      %c0_24 = arith.constant 0 : index
      %56 = vector.load %arg8[%c0_23, %c0_24] : memref<8x128xf32, #tpu.memory_space<vmem>>, vector<8x128xf32>
      tpu.vector_store %arg8[%c0_23, %c0_24], %55 {strides = array<i32>} : memref<8x128xf32, #tpu.memory_space<vmem>>, vector<8x128xf32>,
      %c0_25 = arith.constant 0 : index
      %c0_26 = arith.constant 0 : index
      %57 = vector.load %arg7[%c0_25, %c0_26] : memref<8x128xf32, #tpu.memory_space<vmem>>, vector<8x128xf32>
      tpu.vector_store %arg7[%c0_25, %c0_26], %46 {strides = array<i32>} : memref<8x128xf32, #tpu.memory_space<vmem>>, vector<8x128xf32>,
      %c0_27 = arith.constant 0 : index
      %c0_28 = arith.constant 0 : index
      %58 = vector.load %arg9[%c0_27, %c0_28] : memref<8x128xf32, #tpu.memory_space<vmem>>, vector<8x128xf32>
      %59 = vector.shape_cast %40 : vector<8x128xf32> to vector<1x8x128xf32>
      %cst_29 = arith.constant dense<0.000000e+00> : vector<8x128xf32>
      %60 = vector.multi_reduction <add>, %59, %cst_29 [0] : vector<1x8x128xf32> to vector<8x128xf32>
      %61 = arith.addf %58, %60 : vector<8x128xf32>
      %c0_30 = arith.constant 0 : index
      %c0_31 = arith.constant 0 : index
      %62 = vector.load %arg9[%c0_30, %c0_31] : memref<8x128xf32, #tpu.memory_space<vmem>>, vector<8x128xf32>
      tpu.vector_store %arg9[%c0_30, %c0_31], %61 {strides = array<i32>} : memref<8x128xf32, #tpu.memory_space<vmem>>, vector<8x128xf32>,
      %c0_32 = arith.constant 0 : index
      %c0_33 = arith.constant 0 : index
      %63 = vector.load %arg10[%c0_32, %c0_33] : memref<8x128xf32, #tpu.memory_space<vmem>>, vector<8x128xf32>
      %64 = vector.shape_cast %42 : vector<8x128xf32> to vector<1x8x128xf32>
      %cst_34 = arith.constant dense<0.000000e+00> : vector<8x128xf32>
      %65 = vector.multi_reduction <add>, %64, %cst_34 [0] : vector<1x8x128xf32> to vector<8x128xf32>
      %66 = arith.addf %63, %65 : vector<8x128xf32>
      %c0_35 = arith.constant 0 : index
      %c0_36 = arith.constant 0 : index
      %67 = vector.load %arg10[%c0_35, %c0_36] : memref<8x128xf32, #tpu.memory_space<vmem>>, vector<8x128xf32>
      tpu.vector_store %arg10[%c0_35, %c0_36], %66 {strides = array<i32>} : memref<8x128xf32, #tpu.memory_space<vmem>>, vector<8x128xf32>,
    } else {
    }
    %c0_i32_10 = arith.constant 0 : i32
    %24 = arith.cmpi eq, %arg1, %c0_i32_10 : i32
    %25 = arith.extui %24 : i1 to i32
    %c0_i32_11 = arith.constant 0 : i32
    %26 = arith.cmpi ne, %25, %c0_i32_11 : i32
    scf.if %26 {
      %c0_12 = arith.constant 0 : index
      %c0_13 = arith.constant 0 : index
      %27 = vector.load %arg7[%c0_12, %c0_13] : memref<8x128xf32, #tpu.memory_space<vmem>>, vector<8x128xf32>
      %28 = vector.shape_cast %27 : vector<8x128xf32> to vector<1x8x128xf32>
      %cst_14 = arith.constant dense<0xFF800000> : vector<1xf32>
      %29 = vector.multi_reduction <maximumf>, %28, %cst_14 [1, 2] : vector<1x8x128xf32> to vector<1xf32>
      %30 = vector.shape_cast %29 : vector<1xf32> to vector<1x1x1xf32>
      %31 = vector.extract %30[0, 0, 0] : f32 from vector<1x1x1xf32>
      %c0_15 = arith.constant 0 : index
      %c0_16 = arith.constant 0 : index
      %32 = vector.load %arg8[%c0_15, %c0_16] : memref<8x128xf32, #tpu.memory_space<vmem>>, vector<8x128xf32>
      %c0_17 = arith.constant 0 : index
      %c0_18 = arith.constant 0 : index
      %33 = vector.load %arg7[%c0_17, %c0_18] : memref<8x128xf32, #tpu.memory_space<vmem>>, vector<8x128xf32>
      %34 = vector.broadcast %31 : f32 to vector<8x128xf32>
      %35 = arith.subf %33, %34 : vector<8x128xf32>
      %36 = math.exp %35 : vector<8x128xf32>
      %37 = arith.mulf %32, %36 : vector<8x128xf32>
      %38 = vector.shape_cast %37 : vector<8x128xf32> to vector<1x8x128xf32>
      %cst_19 = arith.constant dense<0.000000e+00> : vector<1xf32>
      %39 = vector.multi_reduction <add>, %38, %cst_19 [1, 2] : vector<1x8x128xf32> to vector<1xf32>
      %40 = vector.shape_cast %39 : vector<1xf32> to vector<1x1x1xf32>
      %41 = vector.extract %40[0, 0, 0] : f32 from vector<1x1x1xf32>
      %c0_20 = arith.constant 0 : index
      %c0_21 = arith.constant 0 : index
      %42 = vector.load %arg9[%c0_20, %c0_21] : memref<8x128xf32, #tpu.memory_space<vmem>>, vector<8x128xf32>
      %43 = vector.shape_cast %42 : vector<8x128xf32> to vector<1x8x128xf32>
      %cst_22 = arith.constant dense<0.000000e+00> : vector<1xf32>
      %44 = vector.multi_reduction <add>, %43, %cst_22 [1, 2] : vector<1x8x128xf32> to vector<1xf32>
      %45 = vector.shape_cast %44 : vector<1xf32> to vector<1x1x1xf32>
      %46 = vector.extract %45[0, 0, 0] : f32 from vector<1x1x1xf32>
      %c0_23 = arith.constant 0 : index
      %c0_24 = arith.constant 0 : index
      %47 = vector.load %arg10[%c0_23, %c0_24] : memref<8x128xf32, #tpu.memory_space<vmem>>, vector<8x128xf32>
      %48 = vector.shape_cast %47 : vector<8x128xf32> to vector<1x8x128xf32>
      %cst_25 = arith.constant dense<0.000000e+00> : vector<1xf32>
      %49 = vector.multi_reduction <add>, %48, %cst_25 [1, 2] : vector<1x8x128xf32> to vector<1xf32>
      %50 = vector.shape_cast %49 : vector<1xf32> to vector<1x1x1xf32>
      %51 = vector.extract %50[0, 0, 0] : f32 from vector<1x1x1xf32>
      %52 = tpu.iota {dimensions = array<i32: 1>} : vector<1x128xi32>
      %c0_i32_26 = arith.constant 0 : i32
      %53 = vector.broadcast %c0_i32_26 : i32 to vector<1x128xi32>
      %54 = arith.cmpi eq, %52, %53 : vector<1x128xi32>
      %c1_i32_27 = arith.constant 1 : i32
      %55 = vector.broadcast %c1_i32_27 : i32 to vector<1x128xi32>
      %56 = arith.cmpi eq, %52, %55 : vector<1x128xi32>
      %c2_i32 = arith.constant 2 : i32
      %57 = vector.broadcast %c2_i32 : i32 to vector<1x128xi32>
      %58 = arith.cmpi eq, %52, %57 : vector<1x128xi32>
      %c3_i32 = arith.constant 3 : i32
      %59 = vector.broadcast %c3_i32 : i32 to vector<1x128xi32>
      %60 = arith.cmpi eq, %52, %59 : vector<1x128xi32>
      %cst_28 = arith.constant 0.000000e+00 : f32
      %61 = vector.broadcast %51 : f32 to vector<1x128xf32>
      %62 = vector.broadcast %cst_28 : f32 to vector<1x128xf32>
      %63 = arith.select %60, %61, %62 : vector<1x128xi1>, vector<1x128xf32>
      %64 = vector.broadcast %46 : f32 to vector<1x128xf32>
      %65 = arith.select %58, %64, %63 : vector<1x128xi1>, vector<1x128xf32>
      %66 = vector.broadcast %41 : f32 to vector<1x128xf32>
      %67 = arith.select %56, %66, %65 : vector<1x128xi1>, vector<1x128xf32>
      %68 = vector.broadcast %31 : f32 to vector<1x128xf32>
      %69 = arith.select %54, %68, %67 : vector<1x128xi1>, vector<1x128xf32>
      %c0_29 = arith.constant 0 : index
      %c0_30 = arith.constant 0 : index
      %70 = vector.load %arg6[%c0_29, %c0_30] : memref<1x128xf32, #tpu.memory_space<vmem>>, vector<1x128xf32>
      tpu.vector_store %arg6[%c0_29, %c0_30], %69 {strides = array<i32>} : memref<1x128xf32, #tpu.memory_space<vmem>>, vector<1x128xf32>,
    } else {
    }
    return
  }
  func.func @transform_0(%arg0: i32, %arg1: i32, %arg2: memref<1xf32, #tpu.memory_space<smem>>) -> (i32, i32) {
    %c1_i32 = arith.constant 1 : i32
    %0 = arith.muli %arg0, %c1_i32 : i32
    %1 = arith.addi %0, %arg1 : i32
    %c0_i32 = arith.constant 0 : i32
    %c0_i32_0 = arith.constant 0 : i32
    return %1, %c0_i32 : i32, i32
  }
  func.func @transform_1(%arg0: i32, %arg1: i32, %arg2: memref<1xf32, #tpu.memory_space<smem>>) -> (i32, i32) {
    %c1_i32 = arith.constant 1 : i32
    %0 = arith.muli %arg0, %c1_i32 : i32
    %1 = arith.addi %0, %arg1 : i32
    %c0_i32 = arith.constant 0 : i32
    %c0_i32_0 = arith.constant 0 : i32
    return %1, %c0_i32 : i32, i32
  }
  func.func @transform_2(%arg0: i32, %arg1: i32, %arg2: memref<1xf32, #tpu.memory_space<smem>>) -> (i32, i32) {
    %c1_i32 = arith.constant 1 : i32
    %0 = arith.muli %arg0, %c1_i32 : i32
    %1 = arith.addi %0, %arg1 : i32
    %c0_i32 = arith.constant 0 : i32
    %c0_i32_0 = arith.constant 0 : i32
    return %1, %c0_i32 : i32, i32
  }
  func.func @transform_3(%arg0: i32, %arg1: i32, %arg2: memref<1xf32, #tpu.memory_space<smem>>) -> (i32, i32) {
    %c0_i32 = arith.constant 0 : i32
    %c0_i32_0 = arith.constant 0 : i32
    return %arg0, %c0_i32 : i32, i32
  }
}

</mosaic_0001>

<llo_original>
// kernel: tpu_custom_call.1
$region0: #{tpu_custom_call.1}
  #allocation0 [shape = 'u32[]', space=smem, size = 0x4, offset = 0x4, fixed_abs, tag = 'smem constant byte address 0x4 - core index']
  #allocation1 [shape = 'u32[144,128]{1,0:T(1,128)}', space=vmem, size = 0x12000, scoped, tag = 'internal scratch']
  #allocation2 [shape = 'f32[8,128]{1,0:T(8,128)}', space=vmem, size = 0x1000, scoped, tag = 'scratch operand']
  #allocation3 [shape = 'f32[8,128]{1,0:T(8,128)}', space=vmem, size = 0x1000, scoped, tag = 'scratch operand']
  #allocation4 [shape = 'f32[8,128]{1,0:T(8,128)}', space=vmem, size = 0x1000, scoped, tag = 'scratch operand']
  #allocation5 [shape = 'f32[8,128]{1,0:T(8,128)}', space=vmem, size = 0x1000, scoped, tag = 'scratch operand']
  #allocation6 [shape = 's32[1]{0}', space=sflag, size = 0x4, scoped, tag = 'scoped memory for tpu_custom_call.1']
  #allocation7 [shape = 'f32[1]{0:T(128)S(6)}', space=smem, size = 0x200, scoped, tag = 'prefetched SMEM operand 0']
  %s0 = inlined_call_operand.<no memory space> [shape: f32[1], index: 0, kind: input, shape index: {}]
  %s1 = inlined_call_operand.hbm [shape: f32[8,128], index: 1, kind: input, shape index: {}]
  %s2 = inlined_call_operand.hbm [shape: f32[8,128], index: 2, kind: input, shape index: {}]
  %s3 = inlined_call_operand.hbm [shape: f32[8,128], index: 3, kind: input, shape index: {}]
  %s4 = inlined_call_operand.hbm [shape: f32[1,128], index: 4, kind: output, shape index: {}]
  %s5 = sld [smem:[#allocation0]]
  $region50: #{tpu_custom_call.1} parent=0
    _
  %s7 = ssub.s32 1, %s5
  %s8 = scalar_select 0, %s7, %s5
  %9 = sst [smem:[#allocation7]] %s0
  $region1: #{tpu_custom_call.1} parent=0
    #allocation8 [shape = 'u8[4096]{0}', space=vmem, size = 0x1000, scoped, tag = 'input window, operand 1, single buffered']
    #allocation9 [shape = 's32[1]{0}', space=sflag, size = 0x4, scoped, tag = 'scoped memory for tpu_custom_call.1']
    #allocation10 [shape = 's32[1]{0}', space=sflag, size = 0x4, scoped, tag = 'scoped memory for tpu_custom_call.1']
    #allocation11 [shape = 'u8[4096]{0}', space=vmem, size = 0x1000, scoped, tag = 'input window, operand 2, single buffered']
    #allocation12 [shape = 's32[1]{0}', space=sflag, size = 0x4, scoped, tag = 'scoped memory for tpu_custom_call.1']
    #allocation13 [shape = 'u8[4096]{0}', space=vmem, size = 0x1000, scoped, tag = 'input window, operand 3, single buffered']
    #allocation14 [shape = 'u8[512]{0}', space=vmem, size = 0x400, scoped, tag = 'output window, operand 0, single buffered']
    %10 = vsyncpa [#allocation9], 0
    %11 = vsyncpa [#allocation12], 0
    %12 = vsyncpa [#allocation10], 0
    // Predicated region
    $region2: #{tpu_custom_call.1} parent=1 // pred_check
      _
    $region3: #{tpu_custom_call.1} parent=1 // pred_check_branch
      %14 = sbr.rel (0) target = $region5
    $region4: #{tpu_custom_call.1} parent=1 // pred_region
      %s15 = sadd.s32 0, 0
      %s17 = ssub.s32 128, 128
      %18 = vsyncadd [#allocation9], %s17
      %s19 = smul.addr %s15, 128
      %s20 = scalar_lea.hbm %s1, %s19
      %s22 = sshll.u32 [#allocation8], 4
      %s23 = int_to_ptr.vmem [resolvable:$true] %s22
      %25 = dma.hbm_to_vmem [thread:$0]  %s20, 128, %s23, [#allocation9]
    $region5: #{tpu_custom_call.1} parent=1 // pred_fallthru
      _
    // Predicated region
    $region6: #{tpu_custom_call.1} parent=1 // pred_check
      _
    $region7: #{tpu_custom_call.1} parent=1 // pred_check_branch
      %27 = sbr.rel (0) target = $region9
    $region8: #{tpu_custom_call.1} parent=1 // pred_region
      %s28 = sadd.s32 0, 0
      %s30 = ssub.s32 128, 128
      %31 = vsyncadd [#allocation12], %s30
      %s32 = smul.addr %s28, 128
      %s33 = scalar_lea.hbm %s2, %s32
      %s35 = sshll.u32 [#allocation11], 4
      %s36 = int_to_ptr.vmem [resolvable:$true] %s35
      %38 = dma.hbm_to_vmem [thread:$0]  %s33, 128, %s36, [#allocation12]
    $region9: #{tpu_custom_call.1} parent=1 // pred_fallthru
      _
    // Predicated region
    $region10: #{tpu_custom_call.1} parent=1 // pred_check
      _
    $region11: #{tpu_custom_call.1} parent=1 // pred_check_branch
      %40 = sbr.rel (0) target = $region13
    $region12: #{tpu_custom_call.1} parent=1 // pred_region
      %s41 = sadd.s32 0, 0
      %s43 = ssub.s32 128, 128
      %44 = vsyncadd [#allocation12], %s43
      %s45 = smul.addr %s41, 128
      %s46 = scalar_lea.hbm %s3, %s45
      %s48 = sshll.u32 [#allocation13], 4
      %s49 = int_to_ptr.vmem [resolvable:$true] %s48
      %51 = dma.hbm_to_vmem [thread:$0]  %s46, 128, %s49, [#allocation12]
    $region13: #{tpu_custom_call.1} parent=1 // pred_fallthru
      _
    // Predicated region
    $region14: #{tpu_custom_call.1} parent=1 // pred_check
      _
    $region15: #{tpu_custom_call.1} parent=1 // pred_check_branch
      %53 = sbr.rel (0) target = $region17
    $region16: #{tpu_custom_call.1} parent=1 // pred_region
      %54 = dma.done [#allocation9], 128
    $region17: #{tpu_custom_call.1} parent=1 // pred_fallthru
      _
    // Predicated region
    $region18: #{tpu_custom_call.1} parent=1 // pred_check
      _
    $region19: #{tpu_custom_call.1} parent=1 // pred_check_branch
      %56 = sbr.rel (0) target = $region21
    $region20: #{tpu_custom_call.1} parent=1 // pred_region
      %57 = dma.done [#allocation12], 128
    $region21: #{tpu_custom_call.1} parent=1 // pred_fallthru
      _
    // Predicated region
    $region22: #{tpu_custom_call.1} parent=1 // pred_check
      _
    $region23: #{tpu_custom_call.1} parent=1 // pred_check_branch
      %59 = sbr.rel (0) target = $region25
    $region24: #{tpu_custom_call.1} parent=1 // pred_region
      %60 = dma.done [#allocation12], 128
    $region25: #{tpu_custom_call.1} parent=1 // pred_fallthru
      _
    %s61 = sadd.s32 0, 0
    %s62 = sadd.s32 0, 0
    %s63 = sadd.s32 0, 0
    %p64 = scmp.eq.s32.totalorder 0, 0
    // Predicated region
    $region26: #{tpu_custom_call.1} parent=1 // pred_check
      %p65 = pneg %p64
    $region27: #{tpu_custom_call.1} parent=1 // pred_check_branch
      %67 = sbr.rel (%p65) target = $region29
    $region28: #{tpu_custom_call.1} parent=1 // pred_region
      %68 = vst [vmem:[#allocation2] sm:$0xff] -1e+30
      %69 = vst [vmem:[#allocation3] sm:$0xff] 0.0
      %70 = vst [vmem:[#allocation4] sm:$0xff] 0.0
      %71 = vst [vmem:[#allocation5] sm:$0xff] 0.0
    $region29: #{tpu_custom_call.1} parent=1 // pred_fallthru
      _
    %s72 = sld [smem:[#allocation7]]
    %v73 = vld [vmem:[#allocation8] sm:$0xff]
    %v74 = vld [vmem:[#allocation13] sm:$0xff]
    %v75 = vld [vmem:[#allocation11] sm:$0xff]
    %v76 = vsub.f32 %v74, %v75
    %v77 = vstv %s72
    %v78 = vmul.f32 %v76, %v77
    %v79 = vmin.f32 %v78, 4.6051702
    %v80 = vmul.f32 %v79, 1.442695
    %v81 = vpow.pop %v80
    %v82 = vmul.f32 %v81, %v73
    %s83 = sadd.s32 0, 0
    %s84 = sadd.s32 %s83, 1
    %s85 = smul.u32 %s84, 1024
    %p86 = scmp.gt.s32.totalorder %s85, 8
    %p87 = scmp.le.s32.totalorder %s85, 8
    // Predicated region
    $region30: #{tpu_custom_call.1} parent=1 // pred_check
      %p88 = pneg %p87
    $region31: #{tpu_custom_call.1} parent=1 // pred_check_branch
      %90 = sbr.rel (%p88) target = $region33
    $region32: #{tpu_custom_call.1} parent=1 // pred_region
      %v91 = vld [vmem:[#allocation2] sm:$0xff]
      %v92 = vmax.f32 %v91, %v78
      %v93 = vsub.f32 %v78, %v92
      %v94 = vmul.f32 %v93, 1.442695
      %v95 = vpow.pop %v94
      %v96 = vld [vmem:[#allocation3] sm:$0xff]
      %v97 = vsub.f32 %v91, %v92
      %v98 = vmul.f32 %v97, 1.442695
      %v99 = vpow.pop %v98
      %v100 = vmul.f32 %v96, %v99
      %v101 = vadd.f32 %v95, 0.0
      %v102 = vadd.f32 %v100, %v101
      %103 = vst [vmem:[#allocation3] sm:$0xff] %v102
      %104 = vst [vmem:[#allocation2] sm:$0xff] %v92
      %v105 = vld [vmem:[#allocation4] sm:$0xff]
      %v106 = vadd.f32 %v76, 0.0
      %v107 = vadd.f32 %v105, %v106
      %108 = vst [vmem:[#allocation4] sm:$0xff] %v107
      %v109 = vld [vmem:[#allocation5] sm:$0xff]
      %v110 = vadd.f32 %v82, 0.0
      %v111 = vadd.f32 %v109, %v110
      %112 = vst [vmem:[#allocation5] sm:$0xff] %v111
    $region33: #{tpu_custom_call.1} parent=1 // pred_fallthru
      _
    // Predicated region
    $region34: #{tpu_custom_call.1} parent=1 // pred_check
      %p113 = pneg %p86
    $region35: #{tpu_custom_call.1} parent=1 // pred_check_branch
      %115 = sbr.rel (%p113) target = $region37
    $region36: #{tpu_custom_call.1} parent=1 // pred_region
      %v116 = vlaneseq
      %v117 = vshrl.u32 %v116, 7
      %v118 = vlaneseq
      %v119 = vand.u32 %v118, 127
      %s120 = smul.u32 %s83, 8
      %v121 = vstv %s120
      %v122 = vadd.s32 %v121, %v117
      %v123 = vmul.u32 %v122, 128
      %v124 = vadd.s32 %v123, %v119
      %vm125 = vcmp.lt.s32.totalorder %v124, 8
      %v126 = vsel %vm125, %v78, -1e+30
      %v127 = vsel %vm125, %v76, 0.0
      %v128 = vsel %vm125, %v82, 0.0
      %v129 = vld [vmem:[#allocation2] sm:$0xff]
      %v130 = vmax.f32 %v129, %v126
      %v131 = vsub.f32 %v126, %v130
      %v132 = vmul.f32 %v131, 1.442695
      %v133 = vpow.pop %v132
      %v134 = vld [vmem:[#allocation3] sm:$0xff]
      %v135 = vsub.f32 %v129, %v130
      %v136 = vmul.f32 %v135, 1.442695
      %v137 = vpow.pop %v136
      %v138 = vmul.f32 %v134, %v137
      %v139 = vadd.f32 %v133, 0.0
      %v140 = vadd.f32 %v138, %v139
      %141 = vst [vmem:[#allocation3] sm:$0xff] %v140
      %142 = vst [vmem:[#allocation2] sm:$0xff] %v130
      %v143 = vld [vmem:[#allocation4] sm:$0xff]
      %v144 = vadd.f32 %v127, 0.0
      %v145 = vadd.f32 %v143, %v144
      %146 = vst [vmem:[#allocation4] sm:$0xff] %v145
      %v147 = vld [vmem:[#allocation5] sm:$0xff]
      %v148 = vadd.f32 %v128, 0.0
      %v149 = vadd.f32 %v147, %v148
      %150 = vst [vmem:[#allocation5] sm:$0xff] %v149
    $region37: #{tpu_custom_call.1} parent=1 // pred_fallthru
      _
    // Predicated region
    $region38: #{tpu_custom_call.1} parent=1 // pred_check
      %p151 = pneg %p64
    $region39: #{tpu_custom_call.1} parent=1 // pred_check_branch
      %153 = sbr.rel (%p151) target = $region41
    $region40: #{tpu_custom_call.1} parent=1 // pred_region
      %v154 = vld [vmem:[#allocation2] sm:$0xff]
      %155 = vmax.xlane.f32.xlu0 %v154
      %v156 = vpop.xlane.xlu0 %155
      %v157 = vrot.slane %v156, 4
      %v158 = vmax.f32 %v156, %v157
      %v159 = vrot.slane %v158, 2
      %v160 = vmax.f32 %v158, %v159
      %v161 = vrot.slane %v160, 1
      %v162 = vmax.f32 %v160, %v161
      %s163 = vtos %v162
      %v164 = vld [vmem:[#allocation3] sm:$0xff]
      %v165 = vstv %s163
      %v166 = vsub.f32 %v154, %v165
      %v167 = vmul.f32 %v166, 1.442695
      %v168 = vpow.pop %v167
      %v169 = vmul.f32 %v164, %v168
      %170 = vadd.xlane.f32.xlu0 %v169
      %v171 = vpop.xlane.xlu0 %170
      %v172 = vrot.slane %v171, 4
      %v173 = vadd.f32 %v171, %v172
      %v174 = vrot.slane %v173, 2
      %v175 = vadd.f32 %v173, %v174
      %v176 = vrot.slane %v175, 1
      %v177 = vadd.f32 %v175, %v176
      %s178 = vtos %v177
      %v179 = vld [vmem:[#allocation4] sm:$0xff]
      %180 = vadd.xlane.f32.xlu0 %v179
      %v181 = vpop.xlane.xlu0 %180
      %v182 = vrot.slane %v181, 4
      %v183 = vadd.f32 %v181, %v182
      %v184 = vrot.slane %v183, 2
      %v185 = vadd.f32 %v183, %v184
      %v186 = vrot.slane %v185, 1
      %v187 = vadd.f32 %v185, %v186
      %s188 = vtos %v187
      %v189 = vld [vmem:[#allocation5] sm:$0xff]
      %190 = vadd.xlane.f32.xlu0 %v189
      %v191 = vpop.xlane.xlu0 %190
      %v192 = vrot.slane %v191, 4
      %v193 = vadd.f32 %v191, %v192
      %v194 = vrot.slane %v193, 2
      %v195 = vadd.f32 %v193, %v194
      %v196 = vrot.slane %v195, 1
      %v197 = vadd.f32 %v195, %v196
      %s198 = vtos %v197
      %v199 = vlaneseq
      %v200 = vand.u32 %v199, 127
      %vm201 = vcmp.eq.s32.totalorder %v200, 0
      %vm202 = vcmp.eq.s32.totalorder %v200, 1
      %vm203 = vcmp.eq.s32.totalorder %v200, 2
      %vm204 = vcmp.eq.s32.totalorder %v200, 3
      %v205 = vstv %s198
      %v206 = vsel %vm204, %v205, 0.0
      %v207 = vstv %s188
      %v208 = vsel %vm203, %v207, %v206
      %v209 = vstv %s178
      %v210 = vsel %vm202, %v209, %v208
      %v211 = vsel %vm201, %v165, %v210
      %212 = vst [vmem:[#allocation14] sm:$0x1] %v211
    $region41: #{tpu_custom_call.1} parent=1 // pred_fallthru
      _
    // Predicated region
    $region42: #{tpu_custom_call.1} parent=1 // pred_check
      _
    $region43: #{tpu_custom_call.1} parent=1 // pred_check_branch
      %214 = sbr.rel (0) target = $region45
    $region44: #{tpu_custom_call.1} parent=1 // pred_region
      %s216 = ssub.s32 16, 16
      %217 = vsyncadd [#allocation10], %s216
      %s219 = sshll.u32 [#allocation14], 4
      %s220 = int_to_ptr.vmem [resolvable:$true] %s219
      %222 = dma.vmem_to_hbm [thread:$0]  %s220, 16, %s4, [#allocation10]
    $region45: #{tpu_custom_call.1} parent=1 // pred_fallthru
      _
    // Predicated region
    $region46: #{tpu_custom_call.1} parent=1 // pred_check
      _
    $region47: #{tpu_custom_call.1} parent=1 // pred_check_branch
      %224 = sbr.rel (0) target = $region49
    $region48: #{tpu_custom_call.1} parent=1 // pred_region
      %225 = dma.done [#allocation10], 16
    $region49: #{tpu_custom_call.1} parent=1 // pred_fallthru
      _
    %226 = vsyncpa [#allocation9], 1
    %227 = vsyncpa [#allocation12], 1
    %228 = vsyncpa [#allocation10], 1

</llo_original>
